<compile_context>
chip_gen: v7x
topology: tpu7x:2x2x1
jax: 0.10.0
libtpu: 0.0.40
codegen_flags: <defaults>
</compile_context>

<pallas_src>
import jax
import jax.numpy as jnp
from jax.experimental import pallas as pl
from jax.experimental.pallas import tpu as pltpu


def _copy_kernel(x_ref, o_ref):
    # Pure pass-through: one VMEM tile in, same tile out (aliased in HBM).
    o_ref[...] = x_ref[...]


def _lane_dense_shape(total: int):
    """Pick a wide, lane-dense last dim (multiple of 128) if possible."""
    for ld in (4096, 2048, 1024, 512, 256, 128):
        if total % ld == 0:
            return total // ld, ld
    return None


def _block_rows(rows: int, ld: int, itemsize: int, target_bytes: int = 2 << 20):
    """Rows per block: ~2 MiB blocks, sublane-aligned (multiple of 8)."""
    if rows < 8 or rows % 8 != 0:
        # Fall back to full sublane extent (allowed: block dim == array dim).
        return rows
    tm = (target_bytes // (ld * itemsize)) // 8 * 8
    tm = max(8, tm)
    return min(rows, tm)


def _pallas_identity_2d(x2d: jax.Array) -> jax.Array:
    rows, ld = x2d.shape
    itemsize = jnp.dtype(x2d.dtype).itemsize
    tm = _block_rows(rows, ld, itemsize)
    grid = (pl.cdiv(rows, tm),)
    nbytes = rows * ld * itemsize

    return pl.pallas_call(
        _copy_kernel,
        out_shape=jax.ShapeDtypeStruct((rows, ld), x2d.dtype),
        grid=grid,
        in_specs=[pl.BlockSpec((tm, ld), lambda i: (i, 0))],
        out_specs=pl.BlockSpec((tm, ld), lambda i: (i, 0)),
        # Alias input buffer to output buffer: no second HBM allocation.
        input_output_aliases={0: 0},
        compiler_params=pltpu.CompilerParams(
            dimension_semantics=("parallel",),
        ),
        cost_estimate=pl.CostEstimate(
            flops=0, transcendentals=0, bytes_accessed=2 * nbytes
        ),
    )(x2d)


def _basenet_forward_impl(x: jax.Array) -> jax.Array:
    """Pallas equivalent of BaseNet.forward (no-op -> aliased identity)."""
    B, C, H, W = x.shape
    total = B * C * H * W

    shp = _lane_dense_shape(total)
    if shp is not None:
        rows, ld = shp
        x2d = x.reshape(rows, ld)
    else:
        # Rare fallback: present the full array as a single (full-extent)
        # block; correct via the "block equals full array dims" exception.
        x2d = x.reshape(B * C * H, W)

    out2d = _pallas_identity_2d(x2d)
    return out2d.reshape(B, C, H, W)


basenet_forward = jax.jit(_basenet_forward_impl)


if __name__ == "__main__":
    key = jax.random.PRNGKey(0)
    # Small NCHW input consistent with a conv-style BaseNet subclass.
    x = jax.random.normal(key, (2, 4, 16, 16), dtype=jnp.float32)

    y = basenet_forward(x)
    jax.block_until_ready(y)

    assert y.shape == x.shape and y.dtype == x.dtype
    assert bool(jnp.allclose(y, x))
    print("KERNEL_OK")
</pallas_src>

<mosaic_0001>
module attributes {stable_mosaic.version = 11 : i64} {
  func.func @_copy_kernel(%arg0: i32, %arg1: memref<1x2048xf32, #tpu.memory_space<vmem>>, %arg2: memref<1x2048xf32, #tpu.memory_space<vmem>>) attributes {dimension_semantics = [#tpu.dimension_semantics<parallel>], iteration_bounds = array<i64: 1>, scalar_prefetch = 0 : i64, scratch_operands = 0 : i64, tpu.core_type = #tpu.core_type<tc>, window_params = [{transform_indices = @transform_0, window_bounds = array<i64: 1, 2048>}, {transform_indices = @transform_1, window_bounds = array<i64: 1, 2048>}]} {
    %c0 = arith.constant 0 : index
    %c0_0 = arith.constant 0 : index
    %0 = vector.load %arg1[%c0, %c0_0] : memref<1x2048xf32, #tpu.memory_space<vmem>>, vector<1x2048xf32>
    %c0_1 = arith.constant 0 : index
    %c0_2 = arith.constant 0 : index
    %1 = vector.load %arg2[%c0_1, %c0_2] : memref<1x2048xf32, #tpu.memory_space<vmem>>, vector<1x2048xf32>
    tpu.vector_store %arg2[%c0_1, %c0_2], %0 {strides = array<i32>} : memref<1x2048xf32, #tpu.memory_space<vmem>>, vector<1x2048xf32>,
    return
  }
  func.func @transform_0(%arg0: i32) -> (i32, i32) {
    %c0_i32 = arith.constant 0 : i32
    %c0_i32_0 = arith.constant 0 : i32
    return %arg0, %c0_i32 : i32, i32
  }
  func.func @transform_1(%arg0: i32) -> (i32, i32) {
    %c0_i32 = arith.constant 0 : i32
    %c0_i32_0 = arith.constant 0 : i32
    return %arg0, %c0_i32 : i32, i32
  }
}

</mosaic_0001>

<llo_original>
// kernel: _basenet_forward_impl.1
$region0: #{_basenet_forward_impl.1}
  #allocation0 [shape = 'u32[]', space=smem, size = 0x4, offset = 0x4, fixed_abs, tag = 'smem constant byte address 0x4 - core index']
  #allocation1 [shape = 'u32[144,128]{1,0:T(1,128)}', space=vmem, size = 0x12000, scoped, tag = 'internal scratch']
  %s0 = inlined_call_operand.vmem [shape: f32[1,2048], index: 0, kind: input, shape index: {}, may-alias: {0,1}]
  %s1 = inlined_call_operand.vmem [shape: f32[1,2048], index: 1, kind: output, shape index: {}, may-alias: {0,1}]
  %s2 = sld [smem:[#allocation0]]
  $region14: #{_basenet_forward_impl.1} parent=0
    _
  %s4 = ssub.s32 1, %s2
  %s5 = scalar_select 0, %s4, %s2
  // Predicated region
  $region2: #{_basenet_forward_impl.1} parent=0 // pred_check
    _
  $region3: #{_basenet_forward_impl.1} parent=0 // pred_check_branch
    %7 = sbr.rel (0) target = $region5
  $region4: #{_basenet_forward_impl.1} parent=0 // pred_region
    _
  $region5: #{_basenet_forward_impl.1} parent=0 // pred_fallthru
    _
  %v8 = vld [vmem:[%s0] sm:$0xff]
  %v9 = vld [vmem:[%s0 + $0x8] sm:$0xff]
  %10 = vst [vmem:[%s1] sm:$0xff] %v8
  %11 = vst [vmem:[%s1 + $0x8] sm:$0xff] %v9
  // Predicated region
  $region6: #{_basenet_forward_impl.1} parent=0 // pred_check
    _
  $region7: #{_basenet_forward_impl.1} parent=0 // pred_check_branch
    %13 = sbr.rel (0) target = $region9
  $region8: #{_basenet_forward_impl.1} parent=0 // pred_region
    _
  $region9: #{_basenet_forward_impl.1} parent=0 // pred_fallthru
    _
  // Predicated region
  $region10: #{_basenet_forward_impl.1} parent=0 // pred_check
    _
  $region11: #{_basenet_forward_impl.1} parent=0 // pred_check_branch
    %15 = sbr.rel (0) target = $region13
  $region12: #{_basenet_forward_impl.1} parent=0 // pred_region
    _
  $region13: #{_basenet_forward_impl.1} parent=0 // pred_fallthru
    _

</llo_original>
